<compile_context>
chip_gen: v7x
topology: tpu7x:2x2x1
jax: 0.10.0
libtpu: 0.0.40
codegen_flags: <defaults>
</compile_context>

<pallas_src>
import functools

import jax
import jax.numpy as jnp
from jax.experimental import pallas as pl


def _location_kernel(h_ref, w_ref, b_ref, noise_ref, out_ref):
    # Affine: (B, H) @ (H, O) on the MXU, f32 accumulation, + bias broadcast on the VPU.
    z = jnp.dot(h_ref[...], w_ref[...], preferred_element_type=jnp.float32) + b_ref[...]
    mu = jnp.tanh(z)

    # Add pre-scaled Gaussian noise and clamp to [-1, 1].
    lt = jnp.tanh(mu + noise_ref[...])

    # Single output slab: out[0] = mu, out[1] = l_t.
    out_ref[0] = mu.astype(out_ref.dtype)
    out_ref[1] = lt.astype(out_ref.dtype)


@functools.partial(jax.jit, static_argnames=("std",))
def location_net_forward(h_t, w, b, key, *, std):
    """LocationNet forward.

    h_t : (B, H) f32 hidden state.
    w   : (H, O) f32 (PyTorch nn.Linear weight, transposed to (in, out)).
    b   : (O,)   f32 bias.
    key : jax.random key for the per-step noise.
    std : noise standard deviation (static).

    Returns (mu, l_t), both (B, O) f32. Forward-only (no autograd / detach semantics).
    """
    B, H = h_t.shape
    O = w.shape[1]

    # Per-step Gaussian noise, drawn with JAX's RNG (works in compiled and interpret modes)
    # and pre-scaled by std so the kernel only does one vadd + tanh for l_t.
    noise = (std * jax.random.normal(key, (B, O))).astype(h_t.dtype)
    b2 = b.reshape(1, O).astype(h_t.dtype)

    out = pl.pallas_call(
        _location_kernel,
        out_shape=jax.ShapeDtypeStruct((2, B, O), h_t.dtype),
        grid=(),
        in_specs=[
            pl.BlockSpec((B, H), lambda: (0, 0)),   # hidden state
            pl.BlockSpec((H, O), lambda: (0, 0)),   # weight (in, out)
            pl.BlockSpec((1, O), lambda: (0, 0)),   # bias (broadcast row)
            pl.BlockSpec((B, O), lambda: (0, 0)),   # pre-scaled noise
        ],
        out_specs=pl.BlockSpec((2, B, O), lambda: (0, 0, 0)),  # [mu ; l_t] slab
    )(h_t, w, b2, noise)

    mu = out[0]
    l_t = out[1]
    return mu, l_t


if __name__ == "__main__":
    key = jax.random.PRNGKey(0)
    k_h, k_w, k_b, k_n = jax.random.split(key, 4)

    batch = 2
    input_size = 32   # rnn_hidden
    output_size = 2   # (x, y) location
    std = 0.17

    h_t = jax.random.normal(k_h, (batch, input_size), dtype=jnp.float32)
    # PyTorch nn.Linear weight is (out, in); store transposed (in, out) for the kernel.
    w = jax.random.normal(k_w, (input_size, output_size), dtype=jnp.float32) * 0.1
    b = jax.random.normal(k_b, (output_size,), dtype=jnp.float32) * 0.1

    mu, l_t = location_net_forward(h_t, w, b, k_n, std=std)
    jax.block_until_ready((mu, l_t))

    # Pure-JAX reference (same noise key / scaling as the wrapper).
    mu_ref = jnp.tanh(h_t @ w + b)
    noise_ref = std * jax.random.normal(k_n, (batch, output_size))
    lt_ref = jnp.tanh(mu_ref + noise_ref)

    assert mu.shape == (batch, output_size) and l_t.shape == (batch, output_size)
    assert jnp.allclose(mu, mu_ref, atol=1e-5), "mu mismatch"
    assert jnp.allclose(l_t, lt_ref, atol=1e-5), "l_t mismatch"
    assert bool(jnp.all(jnp.abs(l_t) <= 1.0)), "l_t out of [-1, 1]"

    print("KERNEL_OK")
</pallas_src>

<mosaic_0001>
module attributes {stable_mosaic.version = 11 : i64} {
  func.func @_location_kernel(%arg0: memref<2x32xf32, #tpu.memory_space<vmem>>, %arg1: memref<32x2xf32, #tpu.memory_space<vmem>>, %arg2: memref<1x2xf32, #tpu.memory_space<vmem>>, %arg3: memref<2x2xf32, #tpu.memory_space<vmem>>, %arg4: memref<2x2x2xf32, #tpu.memory_space<vmem>>) attributes {dimension_semantics = [], scalar_prefetch = 0 : i64, scratch_operands = 0 : i64, tpu.core_type = #tpu.core_type<tc>} {
    %c0 = arith.constant 0 : index
    %c0_0 = arith.constant 0 : index
    %0 = vector.load %arg0[%c0, %c0_0] : memref<2x32xf32, #tpu.memory_space<vmem>>, vector<2x32xf32>
    %c0_1 = arith.constant 0 : index
    %c0_2 = arith.constant 0 : index
    %1 = vector.load %arg1[%c0_1, %c0_2] : memref<32x2xf32, #tpu.memory_space<vmem>>, vector<32x2xf32>
    %cst = arith.constant dense<0.000000e+00> : vector<2x2xf32>
    %2 = tpu.matmul %0, %1, %cst {dimension_numbers = #tpu.dot_dimension_numbers<[1], [0], [0], [1], [0, 0, 1, 1], [], []>} : vector<2x32xf32>, vector<32x2xf32>, vector<2x2xf32> -> vector<2x2xf32>
    %c0_3 = arith.constant 0 : index
    %c0_4 = arith.constant 0 : index
    %3 = vector.load %arg2[%c0_3, %c0_4] : memref<1x2xf32, #tpu.memory_space<vmem>>, vector<1x2xf32>
    %4 = vector.broadcast %3 : vector<1x2xf32> to vector<2x2xf32>
    %5 = arith.addf %2, %4 : vector<2x2xf32>
    %6 = math.tanh %5 : vector<2x2xf32>
    %c0_5 = arith.constant 0 : index
    %c0_6 = arith.constant 0 : index
    %7 = vector.load %arg3[%c0_5, %c0_6] : memref<2x2xf32, #tpu.memory_space<vmem>>, vector<2x2xf32>
    %8 = arith.addf %6, %7 : vector<2x2xf32>
    %9 = math.tanh %8 : vector<2x2xf32>
    %c0_7 = arith.constant 0 : index
    %c0_8 = arith.constant 0 : index
    %c0_9 = arith.constant 0 : index
    %10 = vector.load %arg4[%c0_7, %c0_8, %c0_9] : memref<2x2x2xf32, #tpu.memory_space<vmem>>, vector<1x2x2xf32>
    %11 = vector.shape_cast %10 : vector<1x2x2xf32> to vector<2x2xf32>
    %12 = vector.shape_cast %6 : vector<2x2xf32> to vector<1x2x2xf32>
    tpu.vector_store %arg4[%c0_7, %c0_8, %c0_9], %12 {strides = array<i32>} : memref<2x2x2xf32, #tpu.memory_space<vmem>>, vector<1x2x2xf32>,
    %c1 = arith.constant 1 : index
    %c0_10 = arith.constant 0 : index
    %c0_11 = arith.constant 0 : index
    %13 = vector.load %arg4[%c1, %c0_10, %c0_11] : memref<2x2x2xf32, #tpu.memory_space<vmem>>, vector<1x2x2xf32>
    %14 = vector.shape_cast %13 : vector<1x2x2xf32> to vector<2x2xf32>
    %15 = vector.shape_cast %9 : vector<2x2xf32> to vector<1x2x2xf32>
    tpu.vector_store %arg4[%c1, %c0_10, %c0_11], %15 {strides = array<i32>} : memref<2x2x2xf32, #tpu.memory_space<vmem>>, vector<1x2x2xf32>,
    return
  }
}

</mosaic_0001>

<llo_original>
// kernel: location_net_forward.1
$region0: #{location_net_forward.1}
  #allocation0 [shape = 'u32[]', space=smem, size = 0x4, offset = 0x4, fixed_abs, tag = 'smem constant byte address 0x4 - core index']
  #allocation1 [shape = 'u32[144,128]{1,0:T(1,128)}', space=vmem, size = 0x12000, scoped, tag = 'internal scratch']
  %s0 = inlined_call_operand.vmem [shape: f32[2,32], index: 0, kind: input, shape index: {}]
  %s1 = inlined_call_operand.vmem [shape: f32[32,2], index: 1, kind: input, shape index: {}]
  %s2 = inlined_call_operand.vmem [shape: f32[1,2], index: 2, kind: input, shape index: {}]
  %s3 = inlined_call_operand.vmem [shape: f32[2,2], index: 3, kind: input, shape index: {}]
  %s4 = inlined_call_operand.vmem [shape: f32[2,2,2], index: 4, kind: output, shape index: {}]
  %s5 = sld [smem:[#allocation0]]
  $region26: #{location_net_forward.1} parent=0
    _
  %s7 = ssub.s32 1, %s5
  %s8 = scalar_select 0, %s7, %s5
  // Predicated region
  $region2: #{location_net_forward.1} parent=0 // pred_check
    _
  $region3: #{location_net_forward.1} parent=0 // pred_check_branch
    %10 = sbr.rel (0) target = $region5
  $region4: #{location_net_forward.1} parent=0 // pred_region
    _
  $region5: #{location_net_forward.1} parent=0 // pred_fallthru
    _
  // Predicated region
  $region6: #{location_net_forward.1} parent=0 // pred_check
    _
  $region7: #{location_net_forward.1} parent=0 // pred_check_branch
    %12 = sbr.rel (0) target = $region9
  $region8: #{location_net_forward.1} parent=0 // pred_region
    _
  $region9: #{location_net_forward.1} parent=0 // pred_fallthru
    _
  // Predicated region
  $region10: #{location_net_forward.1} parent=0 // pred_check
    _
  $region11: #{location_net_forward.1} parent=0 // pred_check_branch
    %14 = sbr.rel (0) target = $region13
  $region12: #{location_net_forward.1} parent=0 // pred_region
    _
  $region13: #{location_net_forward.1} parent=0 // pred_fallthru
    _
  // Predicated region
  $region14: #{location_net_forward.1} parent=0 // pred_check
    _
  $region15: #{location_net_forward.1} parent=0 // pred_check_branch
    %16 = sbr.rel (0) target = $region17
  $region16: #{location_net_forward.1} parent=0 // pred_region
    _
  $region17: #{location_net_forward.1} parent=0 // pred_fallthru
    _
  %v17 = vld [vmem:[%s0] sm:$0x3]
  %v18 = vld [vmem:[%s1] sm:$0xff]
  %v19 = vld [vmem:[%s1 + $0x8] sm:$0xff]
  %v20 = vld [vmem:[%s1 + $0x10] sm:$0xff]
  %v21 = vld [vmem:[%s1 + $0x18] sm:$0xff]
  %v22 = vld [vmem:[%s2] sm:$0x1]
  %v24 = vlaneseq
  %v25 = vshrl.u32 %v24, 7
  %v26 = vsub.s32 0, %v25
  %v27 = vrot.slane %v22, %v26
  %vm29 = vcmask 261120
  %v31 = vsel %vm29, %v17, 0
  %33 = vmatprep.subr.mxu0 0.0
  %34 = vmatpush1.msra.mxu0 %v18
  %35 = vmatprep.subr.mxu0 0.0
  %36 = vmatpush1.msra.mxu0 %v19
  %37 = vmatprep.subr.mxu0 0.0
  %38 = vmatpush1.msra.mxu0 %v20
  %39 = vmatprep.subr.mxu0 0.0
  %40 = vmatpush1.msra.mxu0 %v21
  %41 = vmatprep.subr.mxu0 0.0
  %42 = vmatpush1.msra.mxu0 0.0
  %43 = vmatprep.subr.mxu0 0.0
  %44 = vmatpush1.msra.mxu0 0.0
  %45 = vmatprep.subr.mxu0 0.0
  %46 = vmatpush1.msra.mxu0 0.0
  %47 = vmatprep.subr.mxu0 0.0
  %48 = vmatpush1.msra.mxu0 0.0
  %49 = vmatprep.subr.mxu0 0.0
  %50 = vmatpush1.msra.mxu0 0.0
  %51 = vmatprep.subr.mxu0 0.0
  %52 = vmatpush1.msra.mxu0 0.0
  %53 = vmatprep.subr.mxu0 0.0
  %54 = vmatpush1.msra.mxu0 0.0
  %55 = vmatprep.subr.mxu0 0.0
  %56 = vmatpush1.msra.mxu0 0.0
  %57 = vmatprep.subr.mxu0 0.0
  %58 = vmatpush1.msra.mxu0 0.0
  %59 = vmatprep.subr.mxu0 0.0
  %60 = vmatpush1.msra.mxu0 0.0
  %61 = vmatprep.subr.mxu0 0.0
  %62 = vmatpush1.msra.mxu0 0.0
  %63 = vmatprep.subr.mxu0 0.0
  %64 = vmatpush1.msra.mxu0 0.0
  %65 = vmatprep.subr.mxu0 0.0
  %66 = vmatpush1.msra.mxu0 0.0
  %67 = vmatprep.subr.mxu0 0.0
  %68 = vmatpush1.msra.mxu0 0.0
  %69 = vmatprep.subr.mxu0 0.0
  %70 = vmatpush1.msra.mxu0 0.0
  %71 = vmatprep.subr.mxu0 0.0
  %72 = vmatpush1.msra.mxu0 0.0
  %73 = vmatprep.subr.mxu0 0.0
  %74 = vmatpush1.msra.mxu0 0.0
  %75 = vmatprep.subr.mxu0 0.0
  %76 = vmatpush1.msra.mxu0 0.0
  %77 = vmatprep.subr.mxu0 0.0
  %78 = vmatpush1.msra.mxu0 0.0
  %79 = vmatprep.subr.mxu0 0.0
  %80 = vmatpush1.msra.mxu0 0.0
  %81 = vmatprep.subr.mxu0 0.0
  %82 = vmatpush1.msra.mxu0 0.0
  %83 = vmatprep.subr.mxu0 0.0
  %84 = vmatpush1.msra.mxu0 0.0
  %85 = vmatprep.subr.mxu0 0.0
  %86 = vmatpush1.msra.mxu0 0.0
  %87 = vmatprep.subr.mxu0 0.0
  %88 = vmatpush1.msra.mxu0 0.0
  %89 = vmatprep.subr.mxu0 0.0
  %90 = vmatpush1.msra.mxu0 0.0
  %91 = vmatprep.subr.mxu0 0.0
  %92 = vmatpush1.msra.mxu0 0.0
  %93 = vmatprep.subr.mxu0 0.0
  %94 = vmatpush1.msra.mxu0 0.0
  %95 = vmatprep.subr.mxu0 0.0
  %96 = vmatpush1.msra.mxu0 0.0
  %97 = vmatprep.mubr.f32.mxu0 0.0
  %98 = vmatmul.mubr.f32.gmra.mrb[0].mxu0 %v31
  %v99 = vpop.f32.mrb[0].mxu0
  %v100 = vadd.f32 %v27, %v99
  %v101 = vpop.f32.mrb[0].mxu0
  %102 = vdwg.mxu0
  %v103 = vtanh.pop %v100
  %v104 = vld [vmem:[%s3] sm:$0x3]
  %v105 = vadd.f32 %v103, %v104
  %v106 = vtanh.pop %v105
  %vm107 = vcmask 9216
  %108 = vst.msk [vmem:[%s4] sm:$0x3] %vm107, %v103
  %s109 = scalar_lea.vmem %s4, 2
  %110 = vst.msk [vmem:[%s109] sm:$0x3] %vm107, %v106
  // Predicated region
  $region18: #{location_net_forward.1} parent=0 // pred_check
    _
  $region19: #{location_net_forward.1} parent=0 // pred_check_branch
    %112 = sbr.rel (0) target = $region21
  $region20: #{location_net_forward.1} parent=0 // pred_region
    _
  $region21: #{location_net_forward.1} parent=0 // pred_fallthru
    _
  // Predicated region
  $region22: #{location_net_forward.1} parent=0 // pred_check
    _
  $region23: #{location_net_forward.1} parent=0 // pred_check_branch
    %114 = sbr.rel (0) target = $region25
  $region24: #{location_net_forward.1} parent=0 // pred_region
    _
  $region25: #{location_net_forward.1} parent=0 // pred_fallthru
    _

</llo_original>
